<compile_context>
chip_gen: v5e
topology: v5e:2x2
jax: 0.10.0
libtpu: 0.0.40
codegen_flags: <defaults>
</compile_context>

<pallas_src>
import jax
import jax.numpy as jnp
from jax.experimental import pallas as pl
from jax.experimental.pallas import tpu as pltpu


def _round_up(v, m):
    return ((v + m - 1) // m) * m


def make_neural_net(n_in, n_hidden, n_out, *, max_tb=512, min_pallas_batch=16):
    """Builds (pad_params, forward) for the 3-layer MLP with the given feature sizes.

    pad_params(params) -> (w_slab, b_slab): done once at init (weights are static).
    forward(x, w_slab, b_slab): jitted; pads x, runs one batched Pallas call, strips padding.
    Zero padding is exact through the ReLU/tanh/linear chain, so real outputs are bit-exact.
    """
    # Common lane-dense feature width (n_in/n_hidden/n_out all <= 128 here -> d = 128).
    d = _round_up(max(n_in, n_hidden, n_out), 128)

    def pad_params(params):
        w1, b1, w2, b2, w3, b3 = params
        f32 = jnp.float32
        w_slab = jnp.zeros((d, 3 * d), f32)
        w_slab = w_slab.at[:n_in, 0:n_hidden].set(w1.astype(f32))
        w_slab = w_slab.at[:n_hidden, d:d + n_hidden].set(w2.astype(f32))
        w_slab = w_slab.at[:n_hidden, 2 * d:2 * d + n_out].set(w3.astype(f32))
        b_slab = jnp.zeros((1, 3 * d), f32)
        b_slab = b_slab.at[:, 0:n_hidden].set(b1.astype(f32).reshape(1, -1))
        b_slab = b_slab.at[:, d:d + n_hidden].set(b2.astype(f32).reshape(1, -1))
        b_slab = b_slab.at[:, 2 * d:2 * d + n_out].set(b3.astype(f32).reshape(1, -1))
        return w_slab, b_slab

    def mlp_kernel(x_ref, w_ref, b_ref, o_ref):
        # One (tb, d) activation tile per grid step; W/b slabs are VMEM-resident
        # (constant index_map). Static 128-aligned Ref slices pick out each layer.
        x = x_ref[...]
        h1 = jnp.dot(x, w_ref[:, 0:d],
                     preferred_element_type=jnp.float32) + b_ref[:, 0:d]
        h1 = jnp.maximum(h1, 0.0)                                   # F.relu
        h2 = jnp.dot(h1, w_ref[:, d:2 * d],
                     preferred_element_type=jnp.float32) + b_ref[:, d:2 * d]
        h2 = jnp.tanh(h2)                                           # F.tanh
        o_ref[...] = (jnp.dot(h2, w_ref[:, 2 * d:3 * d],
                              preferred_element_type=jnp.float32)
                      + b_ref[:, 2 * d:3 * d])                      # self.out (no activation)

    @jax.jit
    def forward(x, w_slab, b_slab):
        B = x.shape[0]

        # Tiny inference batches (real TORCS case: 1-4 rows): plain XLA dot chain —
        # pallas_call launch + padding can't be amortized there.
        if B < min_pallas_batch:
            xf = x.astype(jnp.float32)
            h1 = jnp.maximum(xf @ w_slab[:n_in, 0:n_hidden] + b_slab[:, 0:n_hidden], 0.0)
            h2 = jnp.tanh(h1 @ w_slab[:n_hidden, d:d + n_hidden]
                          + b_slab[:, d:d + n_hidden])
            return (h2 @ w_slab[:n_hidden, 2 * d:2 * d + n_out]
                    + b_slab[:, 2 * d:2 * d + n_out])

        # Batch tile: as large as the (8-row-aligned) batch up to 512 rows. For B<=512 this
        # gives a single grid step (minimal fixed per-step overhead); for huge stacked
        # batches >=2 steps remain so the "parallel" axis can split across v7x's 2 TCs.
        tb = min(_round_up(B, 8), max_tb)
        B_p = _round_up(B, tb)
        grid = (B_p // tb,)

        x_p = jnp.zeros((B_p, d), jnp.float32).at[:B, :n_in].set(x.astype(jnp.float32))

        # Advisory cost for XLA's scheduler — real (unpadded) dims, not 128-padded.
        cost = pl.CostEstimate(
            flops=2 * B * (n_in * n_hidden + n_hidden * n_hidden + n_hidden * n_out),
            transcendentals=B * n_hidden,
            bytes_accessed=4 * (B * n_in + B * n_out
                                + n_in * n_hidden + n_hidden * n_hidden + n_hidden * n_out
                                + 2 * n_hidden + n_out),
        )

        out_p = pl.pallas_call(
            mlp_kernel,
            out_shape=jax.ShapeDtypeStruct((B_p, d), jnp.float32),
            grid_spec=pltpu.PrefetchScalarGridSpec(
                num_scalar_prefetch=0,
                grid=grid,
                in_specs=[
                    pl.BlockSpec((tb, d), lambda i: (i, 0)),      # x tile (pipelined)
                    pl.BlockSpec((d, 3 * d), lambda i: (0, 0)),   # W1|W2|W3 slab (resident)
                    pl.BlockSpec((1, 3 * d), lambda i: (0, 0)),   # b1|b2|b3 slab (resident)
                ],
                out_specs=pl.BlockSpec((tb, d), lambda i: (i, 0)),
            ),
            compiler_params=pltpu.CompilerParams(
                dimension_semantics=("parallel",),  # splits batch across v7x's 2 TCs when grid > 1
            ),
            cost_estimate=cost,
        )(x_p, w_slab, b_slab)

        # Strip batch/feature padding; padded columns are zero-weight/zero-bias -> exact.
        return out_p[:B, :n_out]

    return pad_params, forward


def init_linear(key, fan_in, fan_out):
    # Deterministic init mimicking torch.nn.Linear (uniform +/- 1/sqrt(fan_in)).
    kw, kb = jax.random.split(key)
    bound = 1.0 / jnp.sqrt(jnp.float32(fan_in))
    w = jax.random.uniform(kw, (fan_in, fan_out), jnp.float32, -bound, bound)
    b = jax.random.uniform(kb, (1, fan_out), jnp.float32, -bound, bound)
    return w, b


def reference_forward(x, params):
    w1, b1, w2, b2, w3, b3 = params
    h1 = jnp.maximum(x @ w1 + b1, 0.0)
    h2 = jnp.tanh(h1 @ w2 + b2)
    return h2 @ w3 + b3


if __name__ == "__main__":
    # Shapes consistent with the module: N_in = len(X[1]) (22 TORCS sensors),
    # N_hidden user-chosen (32), N_out = len(Y[1]) (3 effectors: steer/accel/brake).
    # Batch = 256 stacked timesteps so the Pallas path is actually exercised.
    batch, n_in, n_hidden, n_out = 256, 22, 32, 3

    key = jax.random.PRNGKey(0)
    kx, k1, k2, k3 = jax.random.split(key, 4)

    x = jax.random.normal(kx, (batch, n_in), jnp.float32)
    w1, b1 = init_linear(k1, n_in, n_hidden)
    w2, b2 = init_linear(k2, n_hidden, n_hidden)
    w3, b3 = init_linear(k3, n_hidden, n_out)
    params = (w1, b1, w2, b2, w3, b3)

    pad_params, forward = make_neural_net(n_in, n_hidden, n_out)
    w_slab, b_slab = pad_params(params)          # done once; weights are static
    w_slab, b_slab = jax.block_until_ready((w_slab, b_slab))

    # Pallas path (batch >= 16).
    y = forward(x, w_slab, b_slab)
    jax.block_until_ready(y)
    y_ref = reference_forward(x, params)
    assert y.shape == (batch, n_out)
    assert jnp.allclose(y, y_ref, atol=1e-5, rtol=1e-5)

    # Tiny-batch fallback path (real TORCS inference: ~1-4 rows).
    y_small = forward(x[:4], w_slab, b_slab)
    jax.block_until_ready(y_small)
    assert jnp.allclose(y_small, reference_forward(x[:4], params), atol=1e-5, rtol=1e-5)

    # TODO(synk): predict()'s (x - stats['means']) / stats['stds'] normalisation depends on
    # an external stats.pkl and is outside the module's forward; not replicated here.

    print("KERNEL_OK")
</pallas_src>

<mosaic_0001>
module attributes {stable_mosaic.version = 11 : i64} {
  func.func @mlp_kernel(%arg0: i32, %arg1: memref<256x128xf32, #tpu.memory_space<vmem>>, %arg2: memref<128x384xf32, #tpu.memory_space<vmem>>, %arg3: memref<1x384xf32, #tpu.memory_space<vmem>>, %arg4: memref<256x128xf32, #tpu.memory_space<vmem>>) attributes {dimension_semantics = [#tpu.dimension_semantics<parallel>], iteration_bounds = array<i64: 1>, scalar_prefetch = 0 : i64, scratch_operands = 0 : i64, tpu.core_type = #tpu.core_type<tc>, window_params = [{transform_indices = @transform_0, window_bounds = array<i64: 256, 128>}, {pipeline_mode = #tpu.pipeline_mode<synchronous>, transform_indices = @transform_1, window_bounds = array<i64: 128, 384>}, {pipeline_mode = #tpu.pipeline_mode<synchronous>, transform_indices = @transform_2, window_bounds = array<i64: 1, 384>}, {transform_indices = @transform_3, window_bounds = array<i64: 256, 128>}]} {
    %c0 = arith.constant 0 : index
    %c0_0 = arith.constant 0 : index
    %0 = vector.load %arg1[%c0, %c0_0] : memref<256x128xf32, #tpu.memory_space<vmem>>, vector<256x128xf32>
    %c0_1 = arith.constant 0 : index
    %c0_2 = arith.constant 0 : index
    %1 = vector.load %arg2[%c0_1, %c0_2] : memref<128x384xf32, #tpu.memory_space<vmem>>, vector<128x128xf32>
    %cst = arith.constant dense<0.000000e+00> : vector<256x128xf32>
    %2 = tpu.matmul %0, %1, %cst {dimension_numbers = #tpu.dot_dimension_numbers<[1], [0], [0], [1], [0, 0, 1, 1], [], []>} : vector<256x128xf32>, vector<128x128xf32>, vector<256x128xf32> -> vector<256x128xf32>
    %c0_3 = arith.constant 0 : index
    %c0_4 = arith.constant 0 : index
    %3 = vector.load %arg3[%c0_3, %c0_4] : memref<1x384xf32, #tpu.memory_space<vmem>>, vector<1x128xf32>
    %4 = vector.broadcast %3 : vector<1x128xf32> to vector<256x128xf32>
    %5 = arith.addf %2, %4 : vector<256x128xf32>
    %cst_5 = arith.constant 0.000000e+00 : f32
    %6 = vector.broadcast %cst_5 : f32 to vector<256x128xf32>
    %7 = arith.maximumf %5, %6 : vector<256x128xf32>
    %c0_6 = arith.constant 0 : index
    %c128 = arith.constant 128 : index
    %8 = vector.load %arg2[%c0_6, %c128] : memref<128x384xf32, #tpu.memory_space<vmem>>, vector<128x128xf32>
    %cst_7 = arith.constant dense<0.000000e+00> : vector<256x128xf32>
    %9 = tpu.matmul %7, %8, %cst_7 {dimension_numbers = #tpu.dot_dimension_numbers<[1], [0], [0], [1], [0, 0, 1, 1], [], []>} : vector<256x128xf32>, vector<128x128xf32>, vector<256x128xf32> -> vector<256x128xf32>
    %c0_8 = arith.constant 0 : index
    %c128_9 = arith.constant 128 : index
    %10 = vector.load %arg3[%c0_8, %c128_9] : memref<1x384xf32, #tpu.memory_space<vmem>>, vector<1x128xf32>
    %11 = vector.broadcast %10 : vector<1x128xf32> to vector<256x128xf32>
    %12 = arith.addf %9, %11 : vector<256x128xf32>
    %13 = math.tanh %12 : vector<256x128xf32>
    %c0_10 = arith.constant 0 : index
    %c256 = arith.constant 256 : index
    %14 = vector.load %arg2[%c0_10, %c256] : memref<128x384xf32, #tpu.memory_space<vmem>>, vector<128x128xf32>
    %cst_11 = arith.constant dense<0.000000e+00> : vector<256x128xf32>
    %15 = tpu.matmul %13, %14, %cst_11 {dimension_numbers = #tpu.dot_dimension_numbers<[1], [0], [0], [1], [0, 0, 1, 1], [], []>} : vector<256x128xf32>, vector<128x128xf32>, vector<256x128xf32> -> vector<256x128xf32>
    %c0_12 = arith.constant 0 : index
    %c256_13 = arith.constant 256 : index
    %16 = vector.load %arg3[%c0_12, %c256_13] : memref<1x384xf32, #tpu.memory_space<vmem>>, vector<1x128xf32>
    %17 = vector.broadcast %16 : vector<1x128xf32> to vector<256x128xf32>
    %18 = arith.addf %15, %17 : vector<256x128xf32>
    %c0_14 = arith.constant 0 : index
    %c0_15 = arith.constant 0 : index
    %19 = vector.load %arg4[%c0_14, %c0_15] : memref<256x128xf32, #tpu.memory_space<vmem>>, vector<256x128xf32>
    tpu.vector_store %arg4[%c0_14, %c0_15], %18 {strides = array<i32>} : memref<256x128xf32, #tpu.memory_space<vmem>>, vector<256x128xf32>,
    return
  }
  func.func @transform_0(%arg0: i32) -> (i32, i32) {
    %c0_i32 = arith.constant 0 : i32
    %c0_i32_0 = arith.constant 0 : i32
    return %arg0, %c0_i32 : i32, i32
  }
  func.func @transform_1(%arg0: i32) -> (i32, i32) {
    %c0_i32 = arith.constant 0 : i32
    %c0_i32_0 = arith.constant 0 : i32
    %c0_i32_1 = arith.constant 0 : i32
    return %c0_i32, %c0_i32_0 : i32, i32
  }
  func.func @transform_2(%arg0: i32) -> (i32, i32) {
    %c0_i32 = arith.constant 0 : i32
    %c0_i32_0 = arith.constant 0 : i32
    %c0_i32_1 = arith.constant 0 : i32
    return %c0_i32, %c0_i32_0 : i32, i32
  }
  func.func @transform_3(%arg0: i32) -> (i32, i32) {
    %c0_i32 = arith.constant 0 : i32
    %c0_i32_0 = arith.constant 0 : i32
    return %arg0, %c0_i32 : i32, i32
  }
}

</mosaic_0001>

<llo_original>
// kernel: forward.1
$region0: #{forward.1}
  #allocation0 [shape = 'u32[]', space=smem, size = 0x4, offset = 0x4, fixed_abs, tag = 'smem constant byte address 0x4 - core index']
  #allocation1 [shape = 'u32[72,128]{1,0:T(1,128)}', space=vmem, size = 0x9000, scoped, tag = 'internal scratch']
  %s0 = inlined_call_operand.vmem [shape: f32[256,128], index: 0, kind: input, shape index: {}]
  %s1 = inlined_call_operand.vmem [shape: f32[128,384], index: 1, kind: input, shape index: {}]
  %s2 = inlined_call_operand.vmem [shape: f32[1,384], index: 2, kind: input, shape index: {}]
  %s3 = inlined_call_operand.vmem [shape: f32[256,128], index: 3, kind: output, shape index: {}]
  %s4 = sld [smem:[#allocation0]]
  $region22: #{forward.1} parent=0
    _
  %s6 = ssub.s32 1, %s4
  %s7 = scalar_select 0, %s6, %s4
  // Predicated region
  $region2: #{forward.1} parent=0 // pred_check
    _
  $region3: #{forward.1} parent=0 // pred_check_branch
    %9 = sbr.rel (0) target = $region5
  $region4: #{forward.1} parent=0 // pred_region
    _
  $region5: #{forward.1} parent=0 // pred_fallthru
    _
  // Predicated region
  $region6: #{forward.1} parent=0 // pred_check
    _
  $region7: #{forward.1} parent=0 // pred_check_branch
    %11 = sbr.rel (0) target = $region9
  $region8: #{forward.1} parent=0 // pred_region
    _
  $region9: #{forward.1} parent=0 // pred_fallthru
    _
  // Predicated region
  $region10: #{forward.1} parent=0 // pred_check
    _
  $region11: #{forward.1} parent=0 // pred_check_branch
    %13 = sbr.rel (0) target = $region13
  $region12: #{forward.1} parent=0 // pred_region
    _
  $region13: #{forward.1} parent=0 // pred_fallthru
    _
  %v14 = vld [vmem:[%s0] sm:$0xff]
  %v15 = vld [vmem:[%s0 + $0x8] sm:$0xff]
  %v16 = vld [vmem:[%s0 + $0x10] sm:$0xff]
  %v17 = vld [vmem:[%s0 + $0x18] sm:$0xff]
  %v18 = vld [vmem:[%s0 + $0x20] sm:$0xff]
  %v19 = vld [vmem:[%s0 + $0x28] sm:$0xff]
  %v20 = vld [vmem:[%s0 + $0x30] sm:$0xff]
  %v21 = vld [vmem:[%s0 + $0x38] sm:$0xff]
  %v22 = vld [vmem:[%s0 + $0x40] sm:$0xff]
  %v23 = vld [vmem:[%s0 + $0x48] sm:$0xff]
  %v24 = vld [vmem:[%s0 + $0x50] sm:$0xff]
  %v25 = vld [vmem:[%s0 + $0x58] sm:$0xff]
  %v26 = vld [vmem:[%s0 + $0x60] sm:$0xff]
  %v27 = vld [vmem:[%s0 + $0x68] sm:$0xff]
  %v28 = vld [vmem:[%s0 + $0x70] sm:$0xff]
  %v29 = vld [vmem:[%s0 + $0x78] sm:$0xff]
  %v30 = vld [vmem:[%s0 + $0x80] sm:$0xff]
  %v31 = vld [vmem:[%s0 + $0x88] sm:$0xff]
  %v32 = vld [vmem:[%s0 + $0x90] sm:$0xff]
  %v33 = vld [vmem:[%s0 + $0x98] sm:$0xff]
  %v34 = vld [vmem:[%s0 + $0xa0] sm:$0xff]
  %v35 = vld [vmem:[%s0 + $0xa8] sm:$0xff]
  %v36 = vld [vmem:[%s0 + $0xb0] sm:$0xff]
  %v37 = vld [vmem:[%s0 + $0xb8] sm:$0xff]
  %v38 = vld [vmem:[%s0 + $0xc0] sm:$0xff]
  %v39 = vld [vmem:[%s0 + $0xc8] sm:$0xff]
  %v40 = vld [vmem:[%s0 + $0xd0] sm:$0xff]
  %v41 = vld [vmem:[%s0 + $0xd8] sm:$0xff]
  %v42 = vld [vmem:[%s0 + $0xe0] sm:$0xff]
  %v43 = vld [vmem:[%s0 + $0xe8] sm:$0xff]
  %v44 = vld [vmem:[%s0 + $0xf0] sm:$0xff]
  %v45 = vld [vmem:[%s0 + $0xf8] sm:$0xff]
  %v46 = vld [vmem:[%s1] sm:$0xff]
  %v47 = vld [vmem:[%s1 + $0x18] sm:$0xff]
  %v48 = vld [vmem:[%s1 + $0x30] sm:$0xff]
  %v49 = vld [vmem:[%s1 + $0x48] sm:$0xff]
  %v50 = vld [vmem:[%s1 + $0x60] sm:$0xff]
  %v51 = vld [vmem:[%s1 + $0x78] sm:$0xff]
  %v52 = vld [vmem:[%s1 + $0x90] sm:$0xff]
  %v53 = vld [vmem:[%s1 + $0xa8] sm:$0xff]
  %v54 = vld [vmem:[%s1 + $0xc0] sm:$0xff]
  %v55 = vld [vmem:[%s1 + $0xd8] sm:$0xff]
  %v56 = vld [vmem:[%s1 + $0xf0] sm:$0xff]
  %v57 = vld [vmem:[%s1 + $0x108] sm:$0xff]
  %v58 = vld [vmem:[%s1 + $0x120] sm:$0xff]
  %v59 = vld [vmem:[%s1 + $0x138] sm:$0xff]
  %v60 = vld [vmem:[%s1 + $0x150] sm:$0xff]
  %v61 = vld [vmem:[%s1 + $0x168] sm:$0xff]
  %v62 = vld [vmem:[%s2] sm:$0x1]
  %v64 = vperm.slane %v62, 0
  %66 = vmatpush.msra.mxu0 %v61
  %67 = vmatpush.msra.mxu0 %v60
  %68 = vmatpush.msra.mxu0 %v59
  %69 = vmatpush.msra.mxu0 %v58
  %70 = vmatpush.msra.mxu0 %v57
  %71 = vmatpush.msra.mxu0 %v56
  %72 = vmatpush.msra.mxu0 %v55
  %73 = vmatpush.msra.mxu0 %v54
  %74 = vmatpush.msra.mxu0 %v53
  %75 = vmatpush.msra.mxu0 %v52
  %76 = vmatpush.msra.mxu0 %v51
  %77 = vmatpush.msra.mxu0 %v50
  %78 = vmatpush.msra.mxu0 %v49
  %79 = vmatpush.msra.mxu0 %v48
  %80 = vmatpush.msra.mxu0 %v47
  %81 = vmatpush.msra.mxu0 %v46
  %82 = vmatmul.f32.gmra.mxu0 %v14
  %v83 = vpop.f32.mrf.mxu0
  %v84 = vadd.f32 %v64, %v83
  %85 = vmatmul.f32.gmra.mxu0 %v15
  %v86 = vpop.f32.mrf.mxu0
  %v87 = vadd.f32 %v64, %v86
  %88 = vmatmul.f32.gmra.mxu0 %v16
  %v89 = vpop.f32.mrf.mxu0
  %v90 = vadd.f32 %v64, %v89
  %91 = vmatmul.f32.gmra.mxu0 %v17
  %v92 = vpop.f32.mrf.mxu0
  %v93 = vadd.f32 %v64, %v92
  %94 = vmatmul.f32.gmra.mxu0 %v18
  %v95 = vpop.f32.mrf.mxu0
  %v96 = vadd.f32 %v64, %v95
  %97 = vmatmul.f32.gmra.mxu0 %v19
  %v98 = vpop.f32.mrf.mxu0
  %v99 = vadd.f32 %v64, %v98
  %100 = vmatmul.f32.gmra.mxu0 %v20
  %v101 = vpop.f32.mrf.mxu0
  %v102 = vadd.f32 %v64, %v101
  %103 = vmatmul.f32.gmra.mxu0 %v21
  %v104 = vpop.f32.mrf.mxu0
  %v105 = vadd.f32 %v64, %v104
  %106 = vmatmul.f32.gmra.mxu0 %v22
  %v107 = vpop.f32.mrf.mxu0
  %v108 = vadd.f32 %v64, %v107
  %109 = vmatmul.f32.gmra.mxu0 %v23
  %v110 = vpop.f32.mrf.mxu0
  %v111 = vadd.f32 %v64, %v110
  %112 = vmatmul.f32.gmra.mxu0 %v24
  %v113 = vpop.f32.mrf.mxu0
  %v114 = vadd.f32 %v64, %v113
  %115 = vmatmul.f32.gmra.mxu0 %v25
  %v116 = vpop.f32.mrf.mxu0
  %v117 = vadd.f32 %v64, %v116
  %118 = vmatmul.f32.gmra.mxu0 %v26
  %v119 = vpop.f32.mrf.mxu0
  %v120 = vadd.f32 %v64, %v119
  %121 = vmatmul.f32.gmra.mxu0 %v27
  %v122 = vpop.f32.mrf.mxu0
  %v123 = vadd.f32 %v64, %v122
  %124 = vmatmul.f32.gmra.mxu0 %v28
  %v125 = vpop.f32.mrf.mxu0
  %v126 = vadd.f32 %v64, %v125
  %127 = vmatmul.f32.gmra.mxu0 %v29
  %v128 = vpop.f32.mrf.mxu0
  %v129 = vadd.f32 %v64, %v128
  %130 = vmatmul.f32.gmra.mxu0 %v30
  %v131 = vpop.f32.mrf.mxu0
  %v132 = vadd.f32 %v64, %v131
  %133 = vmatmul.f32.gmra.mxu0 %v31
  %v134 = vpop.f32.mrf.mxu0
  %v135 = vadd.f32 %v64, %v134
  %136 = vmatmul.f32.gmra.mxu0 %v32
  %v137 = vpop.f32.mrf.mxu0
  %v138 = vadd.f32 %v64, %v137
  %139 = vmatmul.f32.gmra.mxu0 %v33
  %v140 = vpop.f32.mrf.mxu0
  %v141 = vadd.f32 %v64, %v140
  %142 = vmatmul.f32.gmra.mxu0 %v34
  %v143 = vpop.f32.mrf.mxu0
  %v144 = vadd.f32 %v64, %v143
  %145 = vmatmul.f32.gmra.mxu0 %v35
  %v146 = vpop.f32.mrf.mxu0
  %v147 = vadd.f32 %v64, %v146
  %148 = vmatmul.f32.gmra.mxu0 %v36
  %v149 = vpop.f32.mrf.mxu0
  %v150 = vadd.f32 %v64, %v149
  %151 = vmatmul.f32.gmra.mxu0 %v37
  %v152 = vpop.f32.mrf.mxu0
  %v153 = vadd.f32 %v64, %v152
  %154 = vmatmul.f32.gmra.mxu0 %v38
  %v155 = vpop.f32.mrf.mxu0
  %v156 = vadd.f32 %v64, %v155
  %157 = vmatmul.f32.gmra.mxu0 %v39
  %v158 = vpop.f32.mrf.mxu0
  %v159 = vadd.f32 %v64, %v158
  %160 = vmatmul.f32.gmra.mxu0 %v40
  %v161 = vpop.f32.mrf.mxu0
  %v162 = vadd.f32 %v64, %v161
  %163 = vmatmul.f32.gmra.mxu0 %v41
  %v164 = vpop.f32.mrf.mxu0
  %v165 = vadd.f32 %v64, %v164
  %166 = vmatmul.f32.gmra.mxu0 %v42
  %v167 = vpop.f32.mrf.mxu0
  %v168 = vadd.f32 %v64, %v167
  %169 = vmatmul.f32.gmra.mxu0 %v43
  %v170 = vpop.f32.mrf.mxu0
  %v171 = vadd.f32 %v64, %v170
  %172 = vmatmul.f32.gmra.mxu0 %v44
  %v173 = vpop.f32.mrf.mxu0
  %v174 = vadd.f32 %v64, %v173
  %175 = vmatmul.f32.gmra.mxu0 %v45
  %v176 = vpop.f32.mrf.mxu0
  %v177 = vadd.f32 %v64, %v176
  %178 = vdwg.mxu0
  %v179 = vmax.f32 %v84, 0.0
  %v180 = vmax.f32 %v87, 0.0
  %v181 = vmax.f32 %v90, 0.0
  %v182 = vmax.f32 %v93, 0.0
  %v183 = vmax.f32 %v96, 0.0
  %v184 = vmax.f32 %v99, 0.0
  %v185 = vmax.f32 %v102, 0.0
  %v186 = vmax.f32 %v105, 0.0
  %v187 = vmax.f32 %v108, 0.0
  %v188 = vmax.f32 %v111, 0.0
  %v189 = vmax.f32 %v114, 0.0
  %v190 = vmax.f32 %v117, 0.0
  %v191 = vmax.f32 %v120, 0.0
  %v192 = vmax.f32 %v123, 0.0
  %v193 = vmax.f32 %v126, 0.0
  %v194 = vmax.f32 %v129, 0.0
  %v195 = vmax.f32 %v132, 0.0
  %v196 = vmax.f32 %v135, 0.0
  %v197 = vmax.f32 %v138, 0.0
  %v198 = vmax.f32 %v141, 0.0
  %v199 = vmax.f32 %v144, 0.0
  %v200 = vmax.f32 %v147, 0.0
  %v201 = vmax.f32 %v150, 0.0
  %v202 = vmax.f32 %v153, 0.0
  %v203 = vmax.f32 %v156, 0.0
  %v204 = vmax.f32 %v159, 0.0
  %v205 = vmax.f32 %v162, 0.0
  %v206 = vmax.f32 %v165, 0.0
  %v207 = vmax.f32 %v168, 0.0
  %v208 = vmax.f32 %v171, 0.0
  %v209 = vmax.f32 %v174, 0.0
  %v210 = vmax.f32 %v177, 0.0
  %v211 = vld [vmem:[%s1 + $0x8] sm:$0xff]
  %v212 = vld [vmem:[%s1 + $0x20] sm:$0xff]
  %v213 = vld [vmem:[%s1 + $0x38] sm:$0xff]
  %v214 = vld [vmem:[%s1 + $0x50] sm:$0xff]
  %v215 = vld [vmem:[%s1 + $0x68] sm:$0xff]
  %v216 = vld [vmem:[%s1 + $0x80] sm:$0xff]
  %v217 = vld [vmem:[%s1 + $0x98] sm:$0xff]
  %v218 = vld [vmem:[%s1 + $0xb0] sm:$0xff]
  %v219 = vld [vmem:[%s1 + $0xc8] sm:$0xff]
  %v220 = vld [vmem:[%s1 + $0xe0] sm:$0xff]
  %v221 = vld [vmem:[%s1 + $0xf8] sm:$0xff]
  %v222 = vld [vmem:[%s1 + $0x110] sm:$0xff]
  %v223 = vld [vmem:[%s1 + $0x128] sm:$0xff]
  %v224 = vld [vmem:[%s1 + $0x140] sm:$0xff]
  %v225 = vld [vmem:[%s1 + $0x158] sm:$0xff]
  %v226 = vld [vmem:[%s1 + $0x170] sm:$0xff]
  %v227 = vld [vmem:[%s2 + $0x1] sm:$0x1]
  %v229 = vperm.slane %v227, 0
  %231 = vmatpush.msra.mxu0 %v226
  %232 = vmatpush.msra.mxu0 %v225
  %233 = vmatpush.msra.mxu0 %v224
  %234 = vmatpush.msra.mxu0 %v223
  %235 = vmatpush.msra.mxu0 %v222
  %236 = vmatpush.msra.mxu0 %v221
  %237 = vmatpush.msra.mxu0 %v220
  %238 = vmatpush.msra.mxu0 %v219
  %239 = vmatpush.msra.mxu0 %v218
  %240 = vmatpush.msra.mxu0 %v217
  %241 = vmatpush.msra.mxu0 %v216
  %242 = vmatpush.msra.mxu0 %v215
  %243 = vmatpush.msra.mxu0 %v214
  %244 = vmatpush.msra.mxu0 %v213
  %245 = vmatpush.msra.mxu0 %v212
  %246 = vmatpush.msra.mxu0 %v211
  %247 = vmatmul.f32.gmra.mxu0 %v179
  %v248 = vpop.f32.mrf.mxu0
  %v249 = vadd.f32 %v229, %v248
  %250 = vmatmul.f32.gmra.mxu0 %v180
  %v251 = vpop.f32.mrf.mxu0
  %v252 = vadd.f32 %v229, %v251
  %253 = vmatmul.f32.gmra.mxu0 %v181
  %v254 = vpop.f32.mrf.mxu0
  %v255 = vadd.f32 %v229, %v254
  %256 = vmatmul.f32.gmra.mxu0 %v182
  %v257 = vpop.f32.mrf.mxu0
  %v258 = vadd.f32 %v229, %v257
  %259 = vmatmul.f32.gmra.mxu0 %v183
  %v260 = vpop.f32.mrf.mxu0
  %v261 = vadd.f32 %v229, %v260
  %262 = vmatmul.f32.gmra.mxu0 %v184
  %v263 = vpop.f32.mrf.mxu0
  %v264 = vadd.f32 %v229, %v263
  %265 = vmatmul.f32.gmra.mxu0 %v185
  %v266 = vpop.f32.mrf.mxu0
  %v267 = vadd.f32 %v229, %v266
  %268 = vmatmul.f32.gmra.mxu0 %v186
  %v269 = vpop.f32.mrf.mxu0
  %v270 = vadd.f32 %v229, %v269
  %271 = vmatmul.f32.gmra.mxu0 %v187
  %v272 = vpop.f32.mrf.mxu0
  %v273 = vadd.f32 %v229, %v272
  %274 = vmatmul.f32.gmra.mxu0 %v188
  %v275 = vpop.f32.mrf.mxu0
  %v276 = vadd.f32 %v229, %v275
  %277 = vmatmul.f32.gmra.mxu0 %v189
  %v278 = vpop.f32.mrf.mxu0
  %v279 = vadd.f32 %v229, %v278
  %280 = vmatmul.f32.gmra.mxu0 %v190
  %v281 = vpop.f32.mrf.mxu0
  %v282 = vadd.f32 %v229, %v281
  %283 = vmatmul.f32.gmra.mxu0 %v191
  %v284 = vpop.f32.mrf.mxu0
  %v285 = vadd.f32 %v229, %v284
  %286 = vmatmul.f32.gmra.mxu0 %v192
  %v287 = vpop.f32.mrf.mxu0
  %v288 = vadd.f32 %v229, %v287
  %289 = vmatmul.f32.gmra.mxu0 %v193
  %v290 = vpop.f32.mrf.mxu0
  %v291 = vadd.f32 %v229, %v290
  %292 = vmatmul.f32.gmra.mxu0 %v194
  %v293 = vpop.f32.mrf.mxu0
  %v294 = vadd.f32 %v229, %v293
  %295 = vmatmul.f32.gmra.mxu0 %v195
  %v296 = vpop.f32.mrf.mxu0
  %v297 = vadd.f32 %v229, %v296
  %298 = vmatmul.f32.gmra.mxu0 %v196
  %v299 = vpop.f32.mrf.mxu0
  %v300 = vadd.f32 %v229, %v299
  %301 = vmatmul.f32.gmra.mxu0 %v197
  %v302 = vpop.f32.mrf.mxu0
  %v303 = vadd.f32 %v229, %v302
  %304 = vmatmul.f32.gmra.mxu0 %v198
  %v305 = vpop.f32.mrf.mxu0
  %v306 = vadd.f32 %v229, %v305
  %307 = vmatmul.f32.gmra.mxu0 %v199
  %v308 = vpop.f32.mrf.mxu0
  %v309 = vadd.f32 %v229, %v308
  %310 = vmatmul.f32.gmra.mxu0 %v200
  %v311 = vpop.f32.mrf.mxu0
  %v312 = vadd.f32 %v229, %v311
  %313 = vmatmul.f32.gmra.mxu0 %v201
  %v314 = vpop.f32.mrf.mxu0
  %v315 = vadd.f32 %v229, %v314
  %316 = vmatmul.f32.gmra.mxu0 %v202
  %v317 = vpop.f32.mrf.mxu0
  %v318 = vadd.f32 %v229, %v317
  %319 = vmatmul.f32.gmra.mxu0 %v203
  %v320 = vpop.f32.mrf.mxu0
  %v321 = vadd.f32 %v229, %v320
  %322 = vmatmul.f32.gmra.mxu0 %v204
  %v323 = vpop.f32.mrf.mxu0
  %v324 = vadd.f32 %v229, %v323
  %325 = vmatmul.f32.gmra.mxu0 %v205
  %v326 = vpop.f32.mrf.mxu0
  %v327 = vadd.f32 %v229, %v326
  %328 = vmatmul.f32.gmra.mxu0 %v206
  %v329 = vpop.f32.mrf.mxu0
  %v330 = vadd.f32 %v229, %v329
  %331 = vmatmul.f32.gmra.mxu0 %v207
  %v332 = vpop.f32.mrf.mxu0
  %v333 = vadd.f32 %v229, %v332
  %334 = vmatmul.f32.gmra.mxu0 %v208
  %v335 = vpop.f32.mrf.mxu0
  %v336 = vadd.f32 %v229, %v335
  %337 = vmatmul.f32.gmra.mxu0 %v209
  %v338 = vpop.f32.mrf.mxu0
  %v339 = vadd.f32 %v229, %v338
  %340 = vmatmul.f32.gmra.mxu0 %v210
  %v341 = vpop.f32.mrf.mxu0
  %v342 = vadd.f32 %v229, %v341
  %343 = vdwg.mxu0
  %v344 = vtanh.pop %v249
  %v345 = vtanh.pop %v252
  %v346 = vtanh.pop %v255
  %v347 = vtanh.pop %v258
  %v348 = vtanh.pop %v261
  %v349 = vtanh.pop %v264
  %v350 = vtanh.pop %v267
  %v351 = vtanh.pop %v270
  %v352 = vtanh.pop %v273
  %v353 = vtanh.pop %v276
  %v354 = vtanh.pop %v279
  %v355 = vtanh.pop %v282
  %v356 = vtanh.pop %v285
  %v357 = vtanh.pop %v288
  %v358 = vtanh.pop %v291
  %v359 = vtanh.pop %v294
  %v360 = vtanh.pop %v297
  %v361 = vtanh.pop %v300
  %v362 = vtanh.pop %v303
  %v363 = vtanh.pop %v306
  %v364 = vtanh.pop %v309
  %v365 = vtanh.pop %v312
  %v366 = vtanh.pop %v315
  %v367 = vtanh.pop %v318
  %v368 = vtanh.pop %v321
  %v369 = vtanh.pop %v324
  %v370 = vtanh.pop %v327
  %v371 = vtanh.pop %v330
  %v372 = vtanh.pop %v333
  %v373 = vtanh.pop %v336
  %v374 = vtanh.pop %v339
  %v375 = vtanh.pop %v342
  %v376 = vld [vmem:[%s1 + $0x10] sm:$0xff]
  %v377 = vld [vmem:[%s1 + $0x28] sm:$0xff]
  %v378 = vld [vmem:[%s1 + $0x40] sm:$0xff]
  %v379 = vld [vmem:[%s1 + $0x58] sm:$0xff]
  %v380 = vld [vmem:[%s1 + $0x70] sm:$0xff]
  %v381 = vld [vmem:[%s1 + $0x88] sm:$0xff]
  %v382 = vld [vmem:[%s1 + $0xa0] sm:$0xff]
  %v383 = vld [vmem:[%s1 + $0xb8] sm:$0xff]
  %v384 = vld [vmem:[%s1 + $0xd0] sm:$0xff]
  %v385 = vld [vmem:[%s1 + $0xe8] sm:$0xff]
  %v386 = vld [vmem:[%s1 + $0x100] sm:$0xff]
  %v387 = vld [vmem:[%s1 + $0x118] sm:$0xff]
  %v388 = vld [vmem:[%s1 + $0x130] sm:$0xff]
  %v389 = vld [vmem:[%s1 + $0x148] sm:$0xff]
  %v390 = vld [vmem:[%s1 + $0x160] sm:$0xff]
  %v391 = vld [vmem:[%s1 + $0x178] sm:$0xff]
  %v392 = vld [vmem:[%s2 + $0x2] sm:$0x1]
  %v394 = vperm.slane %v392, 0
  %396 = vmatpush.msra.mxu0 %v391
  %397 = vmatpush.msra.mxu0 %v390
  %398 = vmatpush.msra.mxu0 %v389
  %399 = vmatpush.msra.mxu0 %v388
  %400 = vmatpush.msra.mxu0 %v387
  %401 = vmatpush.msra.mxu0 %v386
  %402 = vmatpush.msra.mxu0 %v385
  %403 = vmatpush.msra.mxu0 %v384
  %404 = vmatpush.msra.mxu0 %v383
  %405 = vmatpush.msra.mxu0 %v382
  %406 = vmatpush.msra.mxu0 %v381
  %407 = vmatpush.msra.mxu0 %v380
  %408 = vmatpush.msra.mxu0 %v379
  %409 = vmatpush.msra.mxu0 %v378
  %410 = vmatpush.msra.mxu0 %v377
  %411 = vmatpush.msra.mxu0 %v376
  %412 = vmatmul.f32.gmra.mxu0 %v344
  %v413 = vpop.f32.mrf.mxu0
  %v414 = vadd.f32 %v394, %v413
  %415 = vmatmul.f32.gmra.mxu0 %v345
  %v416 = vpop.f32.mrf.mxu0
  %v417 = vadd.f32 %v394, %v416
  %418 = vmatmul.f32.gmra.mxu0 %v346
  %v419 = vpop.f32.mrf.mxu0
  %v420 = vadd.f32 %v394, %v419
  %421 = vmatmul.f32.gmra.mxu0 %v347
  %v422 = vpop.f32.mrf.mxu0
  %v423 = vadd.f32 %v394, %v422
  %424 = vmatmul.f32.gmra.mxu0 %v348
  %v425 = vpop.f32.mrf.mxu0
  %v426 = vadd.f32 %v394, %v425
  %427 = vmatmul.f32.gmra.mxu0 %v349
  %v428 = vpop.f32.mrf.mxu0
  %v429 = vadd.f32 %v394, %v428
  %430 = vmatmul.f32.gmra.mxu0 %v350
  %v431 = vpop.f32.mrf.mxu0
  %v432 = vadd.f32 %v394, %v431
  %433 = vmatmul.f32.gmra.mxu0 %v351
  %v434 = vpop.f32.mrf.mxu0
  %v435 = vadd.f32 %v394, %v434
  %436 = vmatmul.f32.gmra.mxu0 %v352
  %v437 = vpop.f32.mrf.mxu0
  %v438 = vadd.f32 %v394, %v437
  %439 = vmatmul.f32.gmra.mxu0 %v353
  %v440 = vpop.f32.mrf.mxu0
  %v441 = vadd.f32 %v394, %v440
  %442 = vmatmul.f32.gmra.mxu0 %v354
  %v443 = vpop.f32.mrf.mxu0
  %v444 = vadd.f32 %v394, %v443
  %445 = vmatmul.f32.gmra.mxu0 %v355
  %v446 = vpop.f32.mrf.mxu0
  %v447 = vadd.f32 %v394, %v446
  %448 = vmatmul.f32.gmra.mxu0 %v356
  %v449 = vpop.f32.mrf.mxu0
  %v450 = vadd.f32 %v394, %v449
  %451 = vmatmul.f32.gmra.mxu0 %v357
  %v452 = vpop.f32.mrf.mxu0
  %v453 = vadd.f32 %v394, %v452
  %454 = vmatmul.f32.gmra.mxu0 %v358
  %v455 = vpop.f32.mrf.mxu0
  %v456 = vadd.f32 %v394, %v455
  %457 = vmatmul.f32.gmra.mxu0 %v359
  %v458 = vpop.f32.mrf.mxu0
  %v459 = vadd.f32 %v394, %v458
  %460 = vmatmul.f32.gmra.mxu0 %v360
  %v461 = vpop.f32.mrf.mxu0
  %v462 = vadd.f32 %v394, %v461
  %463 = vmatmul.f32.gmra.mxu0 %v361
  %v464 = vpop.f32.mrf.mxu0
  %v465 = vadd.f32 %v394, %v464
  %466 = vmatmul.f32.gmra.mxu0 %v362
  %v467 = vpop.f32.mrf.mxu0
  %v468 = vadd.f32 %v394, %v467
  %469 = vmatmul.f32.gmra.mxu0 %v363
  %v470 = vpop.f32.mrf.mxu0
  %v471 = vadd.f32 %v394, %v470
  %472 = vmatmul.f32.gmra.mxu0 %v364
  %v473 = vpop.f32.mrf.mxu0
  %v474 = vadd.f32 %v394, %v473
  %475 = vmatmul.f32.gmra.mxu0 %v365
  %v476 = vpop.f32.mrf.mxu0
  %v477 = vadd.f32 %v394, %v476
  %478 = vmatmul.f32.gmra.mxu0 %v366
  %v479 = vpop.f32.mrf.mxu0
  %v480 = vadd.f32 %v394, %v479
  %481 = vmatmul.f32.gmra.mxu0 %v367
  %v482 = vpop.f32.mrf.mxu0
  %v483 = vadd.f32 %v394, %v482
  %484 = vmatmul.f32.gmra.mxu0 %v368
  %v485 = vpop.f32.mrf.mxu0
  %v486 = vadd.f32 %v394, %v485
  %487 = vmatmul.f32.gmra.mxu0 %v369
  %v488 = vpop.f32.mrf.mxu0
  %v489 = vadd.f32 %v394, %v488
  %490 = vmatmul.f32.gmra.mxu0 %v370
  %v491 = vpop.f32.mrf.mxu0
  %v492 = vadd.f32 %v394, %v491
  %493 = vmatmul.f32.gmra.mxu0 %v371
  %v494 = vpop.f32.mrf.mxu0
  %v495 = vadd.f32 %v394, %v494
  %496 = vmatmul.f32.gmra.mxu0 %v372
  %v497 = vpop.f32.mrf.mxu0
  %v498 = vadd.f32 %v394, %v497
  %499 = vmatmul.f32.gmra.mxu0 %v373
  %v500 = vpop.f32.mrf.mxu0
  %v501 = vadd.f32 %v394, %v500
  %502 = vmatmul.f32.gmra.mxu0 %v374
  %v503 = vpop.f32.mrf.mxu0
  %v504 = vadd.f32 %v394, %v503
  %505 = vmatmul.f32.gmra.mxu0 %v375
  %v506 = vpop.f32.mrf.mxu0
  %v507 = vadd.f32 %v394, %v506
  %508 = vdwg.mxu0
  %509 = vst [vmem:[%s3] sm:$0xff] %v414
  %510 = vst [vmem:[%s3 + $0x8] sm:$0xff] %v417
  %511 = vst [vmem:[%s3 + $0x10] sm:$0xff] %v420
  %512 = vst [vmem:[%s3 + $0x18] sm:$0xff] %v423
  %513 = vst [vmem:[%s3 + $0x20] sm:$0xff] %v426
  %514 = vst [vmem:[%s3 + $0x28] sm:$0xff] %v429
  %515 = vst [vmem:[%s3 + $0x30] sm:$0xff] %v432
  %516 = vst [vmem:[%s3 + $0x38] sm:$0xff] %v435
  %517 = vst [vmem:[%s3 + $0x40] sm:$0xff] %v438
  %518 = vst [vmem:[%s3 + $0x48] sm:$0xff] %v441
  %519 = vst [vmem:[%s3 + $0x50] sm:$0xff] %v444
  %520 = vst [vmem:[%s3 + $0x58] sm:$0xff] %v447
  %521 = vst [vmem:[%s3 + $0x60] sm:$0xff] %v450
  %522 = vst [vmem:[%s3 + $0x68] sm:$0xff] %v453
  %523 = vst [vmem:[%s3 + $0x70] sm:$0xff] %v456
  %524 = vst [vmem:[%s3 + $0x78] sm:$0xff] %v459
  %525 = vst [vmem:[%s3 + $0x80] sm:$0xff] %v462
  %526 = vst [vmem:[%s3 + $0x88] sm:$0xff] %v465
  %527 = vst [vmem:[%s3 + $0x90] sm:$0xff] %v468
  %528 = vst [vmem:[%s3 + $0x98] sm:$0xff] %v471
  %529 = vst [vmem:[%s3 + $0xa0] sm:$0xff] %v474
  %530 = vst [vmem:[%s3 + $0xa8] sm:$0xff] %v477
  %531 = vst [vmem:[%s3 + $0xb0] sm:$0xff] %v480
  %532 = vst [vmem:[%s3 + $0xb8] sm:$0xff] %v483
  %533 = vst [vmem:[%s3 + $0xc0] sm:$0xff] %v486
  %534 = vst [vmem:[%s3 + $0xc8] sm:$0xff] %v489
  %535 = vst [vmem:[%s3 + $0xd0] sm:$0xff] %v492
  %536 = vst [vmem:[%s3 + $0xd8] sm:$0xff] %v495
  %537 = vst [vmem:[%s3 + $0xe0] sm:$0xff] %v498
  %538 = vst [vmem:[%s3 + $0xe8] sm:$0xff] %v501
  %539 = vst [vmem:[%s3 + $0xf0] sm:$0xff] %v504
  %540 = vst [vmem:[%s3 + $0xf8] sm:$0xff] %v507
  // Predicated region
  $region14: #{forward.1} parent=0 // pred_check
    _
  $region15: #{forward.1} parent=0 // pred_check_branch
    %542 = sbr.rel (0) target = $region17
  $region16: #{forward.1} parent=0 // pred_region
    _
  $region17: #{forward.1} parent=0 // pred_fallthru
    _
  // Predicated region
  $region18: #{forward.1} parent=0 // pred_check
    _
  $region19: #{forward.1} parent=0 // pred_check_branch
    %544 = sbr.rel (0) target = $region21
  $region20: #{forward.1} parent=0 // pred_region
    _
  $region21: #{forward.1} parent=0 // pred_fallthru
    _

</llo_original>
